<compile_context>
chip_gen: v6e
topology: v6e:2x2x1
jax: 0.10.0
libtpu: 0.0.40
codegen_flags: <defaults>
</compile_context>

<pallas_src>
import math
from typing import NamedTuple

import jax
import jax.numpy as jnp
from jax.experimental import pallas as pl
from jax.experimental.pallas import tpu as pltpu

LANE = 128


def _round_up(x, m):
    return (x + m - 1) // m * m


def _vmem_limit_bytes():
    """Per-generation safe VMEM budget (physical capacity minus headroom for
    Mosaic-internal scratch); conservative fallback if the query fails."""
    cap = None
    try:
        cap = getattr(pltpu.get_tpu_info(), "vmem_capacity_bytes", None)
    except Exception:
        cap = None
    if not cap:
        cap = 64 << 20                              # assume smallest (v7x/TC)
    cap = int(cap)
    if cap >= (96 << 20):                           # v5e / v6e: 128 MiB
        return 104 << 20
    return max(cap - (16 << 20), 32 << 20)          # v7x: ~48 MiB


def _choose_tile_b(B, max_tile_b, sub):
    """Batch tile for the resident-weight path."""
    b_al = _round_up(B, sub)
    max_tile_b = max(sub, (max_tile_b // sub) * sub)
    if b_al <= max_tile_b and b_al <= 512:
        return b_al                                 # small problem: 1 grid step
    tb = min(max_tile_b, 512)
    # Keep >= 4 batch tiles when the batch allows (>= 2 per v7x TensorCore).
    per4 = _round_up(pl.cdiv(b_al, 4), sub)
    if per4 >= 256:
        tb = min(tb, per4)
    return max(sub, (tb // sub) * sub)


class MLPParams(NamedTuple):
    w1p: jax.Array   # [d_in_p,  d_hid_p] compute dtype (pre-transposed, padded)
    b1p: jax.Array   # [1, d_hid_p] f32
    w2p: jax.Array   # [d_hid_p, d_out_p] compute dtype
    b2p: jax.Array   # [1, d_out_p] f32
    d_in: int
    d_hid: int
    d_out: int


def prepare_mlp_params(w1, b1, w2, b2, *, compute_dtype=jnp.bfloat16):
    """One-time conversion of PyTorch nn.Linear params (w: [out, in]) into
    padded / transposed / cast kernel-ready buffers.  Call once at model load,
    outside the per-step path."""
    d_hid, d_in = w1.shape
    d_out = w2.shape[0]
    d_in_p, d_hid_p, d_out_p = (_round_up(d, LANE) for d in (d_in, d_hid, d_out))
    f32 = jnp.float32

    w1t = w1.T.astype(compute_dtype)
    if (d_in_p, d_hid_p) != (d_in, d_hid):
        w1t = jnp.zeros((d_in_p, d_hid_p), compute_dtype).at[:d_in, :d_hid].set(w1t)
    w2t = w2.T.astype(compute_dtype)
    if (d_hid_p, d_out_p) != (d_hid, d_out):
        w2t = jnp.zeros((d_hid_p, d_out_p), compute_dtype).at[:d_hid, :d_out].set(w2t)
    b1p = b1.astype(f32).reshape(1, d_hid)
    if d_hid_p != d_hid:
        b1p = jnp.zeros((1, d_hid_p), f32).at[:, :d_hid].set(b1p)
    b2p = b2.astype(f32).reshape(1, d_out)
    if d_out_p != d_out:
        b2p = jnp.zeros((1, d_out_p), f32).at[:, :d_out].set(b2p)
    return MLPParams(w1t, b1p, w2t, b2p, int(d_in), int(d_hid), int(d_out))


# --------------------------------------------------------------------------
# Kernels
# --------------------------------------------------------------------------
def _mlp_kernel_resident(x_ref, w1_ref, b1_ref, w2_ref, b2_ref, o_ref):
    # Whole (padded) weights resident in VMEM; one fused step per batch tile.
    h = jnp.dot(x_ref[...], w1_ref[...], preferred_element_type=jnp.float32)
    h = jnp.maximum(h + b1_ref[...], 0.0)
    o_ref[...] = (jnp.dot(h.astype(w2_ref.dtype), w2_ref[...],
                          preferred_element_type=jnp.float32)
                  + b2_ref[...]).astype(o_ref.dtype)


def _mlp_kernel_htiled(x_ref, w1_ref, b1_ref, w2_ref, b2_ref, o_ref):
    # Hidden dim is the innermost ("arbitrary") grid axis.  The output block
    # index is constant across it, so o_ref stays resident in VMEM and serves
    # directly as the f32 accumulator, with b2 folded into its init.
    h_idx = pl.program_id(1)

    @pl.when(h_idx == 0)
    def _init():
        o_ref[...] = jnp.broadcast_to(b2_ref[...], o_ref.shape)

    h = jnp.dot(x_ref[...], w1_ref[...], preferred_element_type=jnp.float32)
    h = jnp.maximum(h + b1_ref[...], 0.0)
    o_ref[...] += jnp.dot(h.astype(w2_ref.dtype), w2_ref[...],
                          preferred_element_type=jnp.float32)


# --------------------------------------------------------------------------
# Wrapper
# --------------------------------------------------------------------------
def mlp_forward(x, params: MLPParams, *, tile_b=None, tile_h=None,
                force_tiled=False):
    """Fused  y = relu(x @ w1.T + b1) @ w2.T + b2  with pre-prepared params.

    x : [B, d_in];  params from prepare_mlp_params().  Returns [B, d_out]
    in x.dtype.
    """
    B, d_in = x.shape
    assert d_in == params.d_in, "x feature dim does not match params"
    w1p, b1p, w2p, b2p = params.w1p, params.b1p, params.w2p, params.b2p
    d_in_p, d_hid_p = w1p.shape
    d_out_p = w2p.shape[1]
    compute_dtype = w1p.dtype
    cb = jnp.dtype(compute_dtype).itemsize
    sub = 8 * (4 // cb)                     # sublane pack of the compute dtype
    f32 = jnp.float32

    vmem_limit = _vmem_limit_bytes()

    w_bytes = (d_in_p * d_hid_p + d_hid_p * d_out_p) * cb
    bias_bytes = (d_hid_p + d_out_p) * 4
    use_resident = (not force_tiled) and (
        2 * (w_bytes + bias_bytes) <= vmem_limit // 2)

    if use_resident:
        # ---- resident-weight path: grid over batch tiles only ------------
        # per-row cost: x tile + out tile (both double-buffered) + f32 hidden
        per_row = 2 * d_in_p * cb + 2 * d_out_p * 4 + d_hid_p * 4
        row_budget = max(vmem_limit - 2 * (w_bytes + bias_bytes), per_row * sub)
        max_tb = max(sub, (row_budget // per_row) // sub * sub)
        if tile_b is None:
            tile_b = _choose_tile_b(B, max_tb, sub)
        else:
            tile_b = max(sub, _round_up(tile_b, sub))
        B_p = _round_up(B, tile_b)
        grid = (B_p // tile_b,)
        in_specs = [
            pl.BlockSpec((tile_b, d_in_p), lambda i: (i, 0)),
            pl.BlockSpec((d_in_p, d_hid_p), lambda i: (0, 0)),    # resident
            pl.BlockSpec((1, d_hid_p), lambda i: (0, 0)),         # resident
            pl.BlockSpec((d_hid_p, d_out_p), lambda i: (0, 0)),   # resident
            pl.BlockSpec((1, d_out_p), lambda i: (0, 0)),         # resident
        ]
        out_specs = pl.BlockSpec((tile_b, d_out_p), lambda i: (i, 0))
        kernel = _mlp_kernel_resident
        dim_sem = ("parallel",)
    else:
        # ---- h-tiled path: stream weight chunks, accumulate into o_ref ---
        th = 512 if tile_h is None else tile_h            # 256-multiple default
        th = min(_round_up(th, LANE), d_hid_p)
        if d_hid_p % th:
            th = math.gcd(th, d_hid_p)

        def w_tile_bytes(t):                              # double-buffered
            return 2 * (d_in_p * t + t * d_out_p) * cb

        # Re-derive tile_h against the per-generation VMEM budget (v7x has
        # half the VMEM of v5e/v6e, so a v6e-sized tile_h can OOM there).
        while th > LANE and w_tile_bytes(th) > vmem_limit // 2:
            th = max(LANE, (th // 2) // LANE * LANE)
            th = math.gcd(th, d_hid_p)
        tile_h = th

        fixed = w_tile_bytes(tile_h) + 2 * (tile_h + d_out_p) * 4
        per_row = 2 * d_in_p * cb + 2 * d_out_p * 4 + tile_h * 4
        if tile_b is None:
            max_tb = max(sub, ((vmem_limit - fixed) // per_row) // sub * sub)
            # Bigger batch tiles amortize weight re-streaming (dominant HBM
            # traffic on this path); prefer 256-multiples for MXU occupancy.
            tile_b = min(max_tb, 1024, _round_up(B, sub))
            if tile_b >= 512:
                tile_b = (tile_b // 256) * 256
        else:
            tile_b = max(sub, _round_up(tile_b, sub))
        B_p = _round_up(B, tile_b)
        grid = (B_p // tile_b, d_hid_p // tile_h)
        in_specs = [
            pl.BlockSpec((tile_b, d_in_p), lambda i, h: (i, 0)),
            pl.BlockSpec((d_in_p, tile_h), lambda i, h: (0, h)),
            # b1 chunk is a tiny (~tile_h*4 B) DMA per step; kept blocked for
            # robust lowering -- it is noise next to the weight-tile DMAs.
            pl.BlockSpec((1, tile_h), lambda i, h: (0, h)),
            pl.BlockSpec((tile_h, d_out_p), lambda i, h: (h, 0)),
            pl.BlockSpec((1, d_out_p), lambda i, h: (0, 0)),       # resident
        ]
        out_specs = pl.BlockSpec((tile_b, d_out_p), lambda i, h: (i, 0))
        kernel = _mlp_kernel_htiled
        # NOTE: the hidden axis MUST stay innermost and "arbitrary": o_ref is
        # initialized at h==0 and accumulated across h, which is only valid
        # because its block index is constant over h (no mid-loop writeback).
        dim_sem = ("parallel", "arbitrary")

    # Pad / cast x only when actually needed (skip the copy when aligned).
    if (B_p, d_in_p) == (B, d_in):
        xp = x if x.dtype == compute_dtype else x.astype(compute_dtype)
    else:
        xp = jnp.zeros((B_p, d_in_p), compute_dtype).at[:B, :d_in].set(
            x.astype(compute_dtype))

    out = pl.pallas_call(
        kernel,
        out_shape=jax.ShapeDtypeStruct((B_p, d_out_p), f32),
        grid_spec=pltpu.PrefetchScalarGridSpec(
            num_scalar_prefetch=0,
            grid=grid,
            in_specs=in_specs,
            out_specs=out_specs,
        ),
        compiler_params=pltpu.CompilerParams(
            dimension_semantics=dim_sem,
            vmem_limit_bytes=int(vmem_limit),
        ),
    )(xp, w1p, b1p, w2p, b2p)

    if (B_p, d_out_p) != (B, params.d_out):
        out = out[:B, :params.d_out]
    return out if out.dtype == x.dtype else out.astype(x.dtype)


def init_params(key, d_in, d_hid, d_out):
    """Deterministic synthetic params in PyTorch nn.Linear layout."""
    k1, k2, k3, k4 = jax.random.split(key, 4)
    w1 = jax.random.normal(k1, (d_hid, d_in), jnp.float32) / jnp.sqrt(d_in)
    b1 = jax.random.normal(k2, (d_hid,), jnp.float32) * 0.01
    w2 = jax.random.normal(k3, (d_out, d_hid), jnp.float32) / jnp.sqrt(d_hid)
    b2 = jax.random.normal(k4, (d_out,), jnp.float32) * 0.01
    return w1, b1, w2, b2


if __name__ == "__main__":
    # Small shapes consistent with the module (config.d_hid -> 64).
    B, d_in, d_hid, d_out = 128, 32, 64, 16

    key = jax.random.PRNGKey(0)
    kx, kp = jax.random.split(key)
    x = jax.random.normal(kx, (B, d_in), jnp.float32)
    w1, b1, w2, b2 = init_params(kp, d_in, d_hid, d_out)

    bf = lambda a: a.astype(jnp.bfloat16).astype(jnp.float32)

    # One-time weight prep (outside the hot path), then the fused kernel.
    params = prepare_mlp_params(w1, b1, w2, b2)
    y = jax.block_until_ready(mlp_forward(x, params))
    assert y.shape == (B, d_out)

    # Reference matched to the kernel's bf16-on-MXU / f32-accumulate numerics.
    h_ref = jnp.maximum(bf(x) @ bf(w1.T) + b1, 0.0)
    y_bf16_ref = bf(h_ref) @ bf(w2.T) + b2
    assert jnp.allclose(y, y_bf16_ref, atol=1e-2, rtol=1e-2)

    # Loose check against exact f32 module semantics (bf16 rounding only).
    y_f32_ref = jnp.maximum(x @ w1.T + b1, 0.0) @ w2.T + b2
    assert jnp.allclose(y, y_f32_ref, atol=5e-2, rtol=5e-2)

    # Also exercise the h-tiled (weights-don't-fit) path at small scale:
    # d_hid=256, tile_h=128 -> grid (2 batch tiles, 2 hidden chunks).
    d_hid2 = 256
    w1b, b1b, w2b, b2b = init_params(jax.random.PRNGKey(1), d_in, d_hid2, d_out)
    params2 = prepare_mlp_params(w1b, b1b, w2b, b2b)
    y2 = jax.block_until_ready(
        mlp_forward(x, params2, tile_b=64, tile_h=128, force_tiled=True))
    h2_ref = jnp.maximum(bf(x) @ bf(w1b.T) + b1b, 0.0)
    y2_ref = bf(h2_ref) @ bf(w2b.T) + b2b
    assert y2.shape == (B, d_out)
    assert jnp.allclose(y2, y2_ref, atol=1e-2, rtol=1e-2)

    print("KERNEL_OK")
</pallas_src>

<mosaic_0001>
module attributes {stable_mosaic.version = 11 : i64} {
  func.func @_mlp_kernel_resident(%arg0: i32, %arg1: memref<128x128xbf16, #tpu.memory_space<vmem>>, %arg2: memref<128x128xbf16, #tpu.memory_space<vmem>>, %arg3: memref<1x128xf32, #tpu.memory_space<vmem>>, %arg4: memref<128x128xbf16, #tpu.memory_space<vmem>>, %arg5: memref<1x128xf32, #tpu.memory_space<vmem>>, %arg6: memref<128x128xf32, #tpu.memory_space<vmem>>) attributes {dimension_semantics = [#tpu.dimension_semantics<parallel>], iteration_bounds = array<i64: 1>, scalar_prefetch = 0 : i64, scratch_operands = 0 : i64, tpu.core_type = #tpu.core_type<tc>, window_params = [{transform_indices = @transform_0, window_bounds = array<i64: 128, 128>}, {pipeline_mode = #tpu.pipeline_mode<synchronous>, transform_indices = @transform_1, window_bounds = array<i64: 128, 128>}, {pipeline_mode = #tpu.pipeline_mode<synchronous>, transform_indices = @transform_2, window_bounds = array<i64: 1, 128>}, {pipeline_mode = #tpu.pipeline_mode<synchronous>, transform_indices = @transform_3, window_bounds = array<i64: 128, 128>}, {pipeline_mode = #tpu.pipeline_mode<synchronous>, transform_indices = @transform_4, window_bounds = array<i64: 1, 128>}, {transform_indices = @transform_5, window_bounds = array<i64: 128, 128>}]} {
    %c0 = arith.constant 0 : index
    %c0_0 = arith.constant 0 : index
    %0 = vector.load %arg1[%c0, %c0_0] : memref<128x128xbf16, #tpu.memory_space<vmem>>, vector<128x128xbf16>
    %c0_1 = arith.constant 0 : index
    %c0_2 = arith.constant 0 : index
    %1 = vector.load %arg2[%c0_1, %c0_2] : memref<128x128xbf16, #tpu.memory_space<vmem>>, vector<128x128xbf16>
    %cst = arith.constant dense<0.000000e+00> : vector<128x128xf32>
    %2 = tpu.matmul %0, %1, %cst {dimension_numbers = #tpu.dot_dimension_numbers<[1], [0], [0], [1], [0, 0, 1, 1], [], []>} : vector<128x128xbf16>, vector<128x128xbf16>, vector<128x128xf32> -> vector<128x128xf32>
    %c0_3 = arith.constant 0 : index
    %c0_4 = arith.constant 0 : index
    %3 = vector.load %arg3[%c0_3, %c0_4] : memref<1x128xf32, #tpu.memory_space<vmem>>, vector<1x128xf32>
    %4 = vector.broadcast %3 : vector<1x128xf32> to vector<128x128xf32>
    %5 = arith.addf %2, %4 : vector<128x128xf32>
    %cst_5 = arith.constant 0.000000e+00 : f32
    %6 = vector.broadcast %cst_5 : f32 to vector<128x128xf32>
    %7 = arith.maximumf %5, %6 : vector<128x128xf32>
    %8 = arith.truncf %7 : vector<128x128xf32> to vector<128x128xbf16>
    %c0_6 = arith.constant 0 : index
    %c0_7 = arith.constant 0 : index
    %9 = vector.load %arg4[%c0_6, %c0_7] : memref<128x128xbf16, #tpu.memory_space<vmem>>, vector<128x128xbf16>
    %cst_8 = arith.constant dense<0.000000e+00> : vector<128x128xf32>
    %10 = tpu.matmul %8, %9, %cst_8 {dimension_numbers = #tpu.dot_dimension_numbers<[1], [0], [0], [1], [0, 0, 1, 1], [], []>} : vector<128x128xbf16>, vector<128x128xbf16>, vector<128x128xf32> -> vector<128x128xf32>
    %c0_9 = arith.constant 0 : index
    %c0_10 = arith.constant 0 : index
    %11 = vector.load %arg5[%c0_9, %c0_10] : memref<1x128xf32, #tpu.memory_space<vmem>>, vector<1x128xf32>
    %12 = vector.broadcast %11 : vector<1x128xf32> to vector<128x128xf32>
    %13 = arith.addf %10, %12 : vector<128x128xf32>
    %c0_11 = arith.constant 0 : index
    %c0_12 = arith.constant 0 : index
    %14 = vector.load %arg6[%c0_11, %c0_12] : memref<128x128xf32, #tpu.memory_space<vmem>>, vector<128x128xf32>
    tpu.vector_store %arg6[%c0_11, %c0_12], %13 {strides = array<i32>} : memref<128x128xf32, #tpu.memory_space<vmem>>, vector<128x128xf32>,
    return
  }
  func.func @transform_0(%arg0: i32) -> (i32, i32) {
    %c0_i32 = arith.constant 0 : i32
    %c0_i32_0 = arith.constant 0 : i32
    return %arg0, %c0_i32 : i32, i32
  }
  func.func @transform_1(%arg0: i32) -> (i32, i32) {
    %c0_i32 = arith.constant 0 : i32
    %c0_i32_0 = arith.constant 0 : i32
    %c0_i32_1 = arith.constant 0 : i32
    return %c0_i32, %c0_i32_0 : i32, i32
  }
  func.func @transform_2(%arg0: i32) -> (i32, i32) {
    %c0_i32 = arith.constant 0 : i32
    %c0_i32_0 = arith.constant 0 : i32
    %c0_i32_1 = arith.constant 0 : i32
    return %c0_i32, %c0_i32_0 : i32, i32
  }
  func.func @transform_3(%arg0: i32) -> (i32, i32) {
    %c0_i32 = arith.constant 0 : i32
    %c0_i32_0 = arith.constant 0 : i32
    %c0_i32_1 = arith.constant 0 : i32
    return %c0_i32, %c0_i32_0 : i32, i32
  }
  func.func @transform_4(%arg0: i32) -> (i32, i32) {
    %c0_i32 = arith.constant 0 : i32
    %c0_i32_0 = arith.constant 0 : i32
    %c0_i32_1 = arith.constant 0 : i32
    return %c0_i32, %c0_i32_0 : i32, i32
  }
  func.func @transform_5(%arg0: i32) -> (i32, i32) {
    %c0_i32 = arith.constant 0 : i32
    %c0_i32_0 = arith.constant 0 : i32
    return %arg0, %c0_i32 : i32, i32
  }
}

</mosaic_0001>

<llo_original>
// kernel: tpu_custom_call.1
$region0: #{tpu_custom_call.1}
  #allocation0 [shape = 'u32[]', space=smem, size = 0x4, offset = 0x4, fixed_abs, tag = 'smem constant byte address 0x4 - core index']
  #allocation1 [shape = 'u32[144,128]{1,0:T(1,128)}', space=vmem, size = 0x12000, scoped, tag = 'internal scratch']
  %s0 = inlined_call_operand.hbm [shape: bf16[128,128], index: 0, kind: input, shape index: {}]
  %s1 = inlined_call_operand.hbm [shape: bf16[128,128], index: 1, kind: input, shape index: {}]
  %s2 = inlined_call_operand.vmem [shape: f32[1,128], index: 2, kind: input, shape index: {}]
  %s3 = inlined_call_operand.hbm [shape: bf16[128,128], index: 3, kind: input, shape index: {}]
  %s4 = inlined_call_operand.vmem [shape: f32[1,128], index: 4, kind: input, shape index: {}]
  %s5 = inlined_call_operand.hbm [shape: f32[128,128], index: 5, kind: output, shape index: {}]
  %s6 = sld [smem:[#allocation0]]
  $region42: #{tpu_custom_call.1} parent=0
    _
  %s8 = ssub.s32 1, %s6
  %s9 = scalar_select 0, %s8, %s6
  $region1: #{tpu_custom_call.1} parent=0
    #allocation2 [shape = 'u8[32768]{0}', space=vmem, size = 0x8000, scoped, tag = 'input window, operand 0, single buffered']
    #allocation3 [shape = 's32[1]{0}', space=sflag, size = 0x4, scoped, tag = 'scoped memory for tpu_custom_call.1']
    #allocation4 [shape = 's32[1]{0}', space=sflag, size = 0x4, scoped, tag = 'scoped memory for tpu_custom_call.1']
    #allocation5 [shape = 'u8[32768]{0}', space=vmem, size = 0x8000, scoped, tag = 'input window, operand 1, single buffered']
    #allocation6 [shape = 's32[1]{0}', space=sflag, size = 0x4, scoped, tag = 'scoped memory for tpu_custom_call.1']
    #allocation7 [shape = 'u8[32768]{0}', space=vmem, size = 0x8000, scoped, tag = 'input window, operand 3, single buffered']
    #allocation8 [shape = 'u8[65536]{0}', space=vmem, size = 0x10000, scoped, tag = 'output window, operand 0, single buffered']
    %10 = vsyncpa [#allocation3], 0
    %11 = vsyncpa [#allocation6], 0
    %12 = vsyncpa [#allocation4], 0
    // Predicated region
    $region2: #{tpu_custom_call.1} parent=1 // pred_check
      _
    $region3: #{tpu_custom_call.1} parent=1 // pred_check_branch
      %14 = sbr.rel (0) target = $region5
    $region4: #{tpu_custom_call.1} parent=1 // pred_region
      %s16 = ssub.s32 1024, 1024
      %17 = vsyncadd [#allocation3], %s16
      %s18 = sshll.u32 [#allocation2], 4
      %s19 = int_to_ptr.vmem [resolvable:$true] %s18
      %24 = dma.hbm_to_vmem [thread:$0]  %s0, 1024, %s19, [#allocation3], 64, 64, 4
    $region5: #{tpu_custom_call.1} parent=1 // pred_fallthru
      _
    // Predicated region
    $region6: #{tpu_custom_call.1} parent=1 // pred_check
      _
    $region7: #{tpu_custom_call.1} parent=1 // pred_check_branch
      %26 = sbr.rel (0) target = $region9
    $region8: #{tpu_custom_call.1} parent=1 // pred_region
      %s28 = ssub.s32 1024, 1024
      %29 = vsyncadd [#allocation6], %s28
      %s30 = sshll.u32 [#allocation5], 4
      %s31 = int_to_ptr.vmem [resolvable:$true] %s30
      %36 = dma.hbm_to_vmem [thread:$0]  %s1, 1024, %s31, [#allocation6], 64, 64, 4
    $region9: #{tpu_custom_call.1} parent=1 // pred_fallthru
      _
    // Predicated region
    $region10: #{tpu_custom_call.1} parent=1 // pred_check
      _
    $region11: #{tpu_custom_call.1} parent=1 // pred_check_branch
      %38 = sbr.rel (0) target = $region13
    $region12: #{tpu_custom_call.1} parent=1 // pred_region
      _
    $region13: #{tpu_custom_call.1} parent=1 // pred_fallthru
      _
    // Predicated region
    $region14: #{tpu_custom_call.1} parent=1 // pred_check
      _
    $region15: #{tpu_custom_call.1} parent=1 // pred_check_branch
      %40 = sbr.rel (0) target = $region17
    $region16: #{tpu_custom_call.1} parent=1 // pred_region
      %s42 = ssub.s32 1024, 1024
      %43 = vsyncadd [#allocation6], %s42
      %s44 = sshll.u32 [#allocation7], 4
      %s45 = int_to_ptr.vmem [resolvable:$true] %s44
      %50 = dma.hbm_to_vmem [thread:$0]  %s3, 1024, %s45, [#allocation6], 64, 64, 4
    $region17: #{tpu_custom_call.1} parent=1 // pred_fallthru
      _
    // Predicated region
    $region18: #{tpu_custom_call.1} parent=1 // pred_check
      _
    $region19: #{tpu_custom_call.1} parent=1 // pred_check_branch
      %52 = sbr.rel (0) target = $region21
    $region20: #{tpu_custom_call.1} parent=1 // pred_region
      _
    $region21: #{tpu_custom_call.1} parent=1 // pred_fallthru
      _
    // Predicated region
    $region22: #{tpu_custom_call.1} parent=1 // pred_check
      _
    $region23: #{tpu_custom_call.1} parent=1 // pred_check_branch
      %54 = sbr.rel (0) target = $region25
    $region24: #{tpu_custom_call.1} parent=1 // pred_region
      %55 = dma.done [#allocation3], 1024
    $region25: #{tpu_custom_call.1} parent=1 // pred_fallthru
      _
    // Predicated region
    $region26: #{tpu_custom_call.1} parent=1 // pred_check
      _
    $region27: #{tpu_custom_call.1} parent=1 // pred_check_branch
      %57 = sbr.rel (0) target = $region29
    $region28: #{tpu_custom_call.1} parent=1 // pred_region
      %58 = dma.done [#allocation6], 1024
    $region29: #{tpu_custom_call.1} parent=1 // pred_fallthru
      _
    // Predicated region
    $region30: #{tpu_custom_call.1} parent=1 // pred_check
      _
    $region31: #{tpu_custom_call.1} parent=1 // pred_check_branch
      %60 = sbr.rel (0) target = $region33
    $region32: #{tpu_custom_call.1} parent=1 // pred_region
      %61 = dma.done [#allocation6], 1024
    $region33: #{tpu_custom_call.1} parent=1 // pred_fallthru
      _
    %v63 = vld [vmem:[#allocation2] sm:$0xf]
    %v64 = vld [vmem:[#allocation2 + $0x4] sm:$0xf]
    %v65 = vld [vmem:[#allocation2 + $0x8] sm:$0xf]
    %v66 = vld [vmem:[#allocation2 + $0xc] sm:$0xf]
    %v67 = vld [vmem:[#allocation2 + $0x10] sm:$0xf]
    %v68 = vld [vmem:[#allocation2 + $0x14] sm:$0xf]
    %v69 = vld [vmem:[#allocation2 + $0x18] sm:$0xf]
    %v70 = vld [vmem:[#allocation2 + $0x1c] sm:$0xf]
    %v71 = vld [vmem:[#allocation2 + $0x20] sm:$0xf]
    %v72 = vld [vmem:[#allocation2 + $0x24] sm:$0xf]
    %v73 = vld [vmem:[#allocation2 + $0x28] sm:$0xf]
    %v74 = vld [vmem:[#allocation2 + $0x2c] sm:$0xf]
    %v75 = vld [vmem:[#allocation2 + $0x30] sm:$0xf]
    %v76 = vld [vmem:[#allocation2 + $0x34] sm:$0xf]
    %v77 = vld [vmem:[#allocation2 + $0x38] sm:$0xf]
    %v78 = vld [vmem:[#allocation2 + $0x3c] sm:$0xf]
    %v79 = vld [vmem:[#allocation5] sm:$0xf]
    %v80 = vld [vmem:[#allocation5 + $0x4] sm:$0xf]
    %v81 = vld [vmem:[#allocation5 + $0x8] sm:$0xf]
    %v82 = vld [vmem:[#allocation5 + $0xc] sm:$0xf]
    %v83 = vld [vmem:[#allocation5 + $0x10] sm:$0xf]
    %v84 = vld [vmem:[#allocation5 + $0x14] sm:$0xf]
    %v85 = vld [vmem:[#allocation5 + $0x18] sm:$0xf]
    %v86 = vld [vmem:[#allocation5 + $0x1c] sm:$0xf]
    %v87 = vld [vmem:[#allocation5 + $0x20] sm:$0xf]
    %v88 = vld [vmem:[#allocation5 + $0x24] sm:$0xf]
    %v89 = vld [vmem:[#allocation5 + $0x28] sm:$0xf]
    %v90 = vld [vmem:[#allocation5 + $0x2c] sm:$0xf]
    %v91 = vld [vmem:[#allocation5 + $0x30] sm:$0xf]
    %v92 = vld [vmem:[#allocation5 + $0x34] sm:$0xf]
    %v93 = vld [vmem:[#allocation5 + $0x38] sm:$0xf]
    %v94 = vld [vmem:[#allocation5 + $0x3c] sm:$0xf]
    %v95 = vld [vmem:[%s2] sm:$0x1]
    %v97 = vlaneseq
    %v98 = vshrl.u32 %v97, 7
    %v99 = vsub.s32 0, %v98
    %v100 = vrot.slane %v95, %v99
    %v118 = vunpack.c.l.b16 %v63
    %v119 = vunpack.c.l.b16 %v64
    %v120 = vunpack.c.l.b16 %v65
    %v121 = vunpack.c.l.b16 %v66
    %v122 = vunpack.c.l.b16 %v67
    %v123 = vunpack.c.l.b16 %v68
    %v124 = vunpack.c.l.b16 %v69
    %v125 = vunpack.c.l.b16 %v70
    %v126 = vunpack.c.l.b16 %v71
    %v127 = vunpack.c.l.b16 %v72
    %v128 = vunpack.c.l.b16 %v73
    %v129 = vunpack.c.l.b16 %v74
    %v130 = vunpack.c.l.b16 %v75
    %v131 = vunpack.c.l.b16 %v76
    %v132 = vunpack.c.l.b16 %v77
    %v133 = vunpack.c.l.b16 %v78
    %v134 = vpack.c.b16 %v119, %v118
    %v135 = vpack.c.b16 %v121, %v120
    %v136 = vpack.c.b16 %v123, %v122
    %v137 = vpack.c.b16 %v125, %v124
    %v138 = vpack.c.b16 %v127, %v126
    %v139 = vpack.c.b16 %v129, %v128
    %v140 = vpack.c.b16 %v131, %v130
    %v141 = vpack.c.b16 %v133, %v132
    %v166 = vunpack.c.l.b16 %v79
    %v167 = vunpack.c.l.b16 %v80
    %v168 = vunpack.c.l.b16 %v81
    %v169 = vunpack.c.l.b16 %v82
    %v170 = vunpack.c.l.b16 %v83
    %v171 = vunpack.c.l.b16 %v84
    %v172 = vunpack.c.l.b16 %v85
    %v173 = vunpack.c.l.b16 %v86
    %v174 = vunpack.c.l.b16 %v87
    %v175 = vunpack.c.l.b16 %v88
    %v176 = vunpack.c.l.b16 %v89
    %v177 = vunpack.c.l.b16 %v90
    %v178 = vunpack.c.l.b16 %v91
    %v179 = vunpack.c.l.b16 %v92
    %v180 = vunpack.c.l.b16 %v93
    %v181 = vunpack.c.l.b16 %v94
    %v182 = vpack.c.b16 %v167, %v166
    %v183 = vpack.c.b16 %v169, %v168
    %v184 = vpack.c.b16 %v171, %v170
    %v185 = vpack.c.b16 %v173, %v172
    %v186 = vpack.c.b16 %v175, %v174
    %v187 = vpack.c.b16 %v177, %v176
    %v188 = vpack.c.b16 %v179, %v178
    %v189 = vpack.c.b16 %v181, %v180
    %198 = vmatprep.subr.bf16.mxu0 0
    %199 = vmatpush1.bf16.msra.mxu0 %v189
    %200 = vmatprep.subr.bf16.mxu0 0
    %201 = vmatpush1.bf16.msra.mxu0 %v188
    %202 = vmatprep.subr.bf16.mxu0 0
    %203 = vmatpush1.bf16.msra.mxu0 %v187
    %204 = vmatprep.subr.bf16.mxu0 0
    %205 = vmatpush1.bf16.msra.mxu0 %v186
    %206 = vmatprep.subr.bf16.mxu0 0
    %207 = vmatpush1.bf16.msra.mxu0 %v185
    %208 = vmatprep.subr.bf16.mxu0 0
    %209 = vmatpush1.bf16.msra.mxu0 %v184
    %210 = vmatprep.subr.bf16.mxu0 0
    %211 = vmatpush1.bf16.msra.mxu0 %v183
    %212 = vmatprep.subr.bf16.mxu0 0
    %213 = vmatpush1.bf16.msra.mxu0 %v182
    %214 = vmatprep.subr.bf16.mxu0 0
    %215 = vmatpush2.bf16.msra.mxu0 0
    %216 = vmatprep.subr.bf16.mxu0 0
    %217 = vmatpush2.bf16.msra.mxu0 0
    %218 = vmatprep.subr.bf16.mxu0 0
    %219 = vmatpush2.bf16.msra.mxu0 0
    %220 = vmatprep.subr.bf16.mxu0 0
    %221 = vmatpush2.bf16.msra.mxu0 0
    %222 = vmatprep.subr.bf16.mxu0 0
    %223 = vmatpush2.bf16.msra.mxu0 0
    %224 = vmatprep.subr.bf16.mxu0 0
    %225 = vmatpush2.bf16.msra.mxu0 0
    %226 = vmatprep.subr.bf16.mxu0 0
    %227 = vmatpush2.bf16.msra.mxu0 0
    %228 = vmatprep.subr.bf16.mxu0 0
    %229 = vmatpush2.bf16.msra.mxu0 0
    %230 = vmatprep.mubr.bf16.mxu0 0
    %231 = vmatmul.mubr.bf16.gmra.mxu0 %v134
    %v232 = vpop.f32.mrf.mxu0
    %v233 = vadd.f32 %v100, %v232
    %v234 = vpop.f32.mrf.mxu0
    %v235 = vpop.f32.mrf.mxu0
    %v236 = vadd.f32 %v100, %v235
    %v237 = vpop.f32.mrf.mxu0
    %238 = vmatprep.mubr.bf16.mxu0 0
    %239 = vmatmul.mubr.bf16.gmra.mxu0 %v135
    %v240 = vpop.f32.mrf.mxu0
    %v241 = vadd.f32 %v100, %v240
    %v242 = vpop.f32.mrf.mxu0
    %v243 = vpop.f32.mrf.mxu0
    %v244 = vadd.f32 %v100, %v243
    %v245 = vpop.f32.mrf.mxu0
    %246 = vmatprep.mubr.bf16.mxu0 0
    %247 = vmatmul.mubr.bf16.gmra.mxu0 %v136
    %v248 = vpop.f32.mrf.mxu0
    %v249 = vadd.f32 %v100, %v248
    %v250 = vpop.f32.mrf.mxu0
    %v251 = vpop.f32.mrf.mxu0
    %v252 = vadd.f32 %v100, %v251
    %v253 = vpop.f32.mrf.mxu0
    %254 = vmatprep.mubr.bf16.mxu0 0
    %255 = vmatmul.mubr.bf16.gmra.mxu0 %v137
    %v256 = vpop.f32.mrf.mxu0
    %v257 = vadd.f32 %v100, %v256
    %v258 = vpop.f32.mrf.mxu0
    %v259 = vpop.f32.mrf.mxu0
    %v260 = vadd.f32 %v100, %v259
    %v261 = vpop.f32.mrf.mxu0
    %262 = vmatprep.mubr.bf16.mxu0 0
    %263 = vmatmul.mubr.bf16.gmra.mxu0 %v138
    %v264 = vpop.f32.mrf.mxu0
    %v265 = vadd.f32 %v100, %v264
    %v266 = vpop.f32.mrf.mxu0
    %v267 = vpop.f32.mrf.mxu0
    %v268 = vadd.f32 %v100, %v267
    %v269 = vpop.f32.mrf.mxu0
    %270 = vmatprep.mubr.bf16.mxu0 0
    %271 = vmatmul.mubr.bf16.gmra.mxu0 %v139
    %v272 = vpop.f32.mrf.mxu0
    %v273 = vadd.f32 %v100, %v272
    %v274 = vpop.f32.mrf.mxu0
    %v275 = vpop.f32.mrf.mxu0
    %v276 = vadd.f32 %v100, %v275
    %v277 = vpop.f32.mrf.mxu0
    %278 = vmatprep.mubr.bf16.mxu0 0
    %279 = vmatmul.mubr.bf16.gmra.mxu0 %v140
    %v280 = vpop.f32.mrf.mxu0
    %v281 = vadd.f32 %v100, %v280
    %v282 = vpop.f32.mrf.mxu0
    %v283 = vpop.f32.mrf.mxu0
    %v284 = vadd.f32 %v100, %v283
    %v285 = vpop.f32.mrf.mxu0
    %286 = vmatprep.mubr.bf16.mxu0 0
    %287 = vmatmul.mubr.bf16.gmra.mxu0 %v141
    %v288 = vpop.f32.mrf.mxu0
    %v289 = vadd.f32 %v100, %v288
    %v290 = vpop.f32.mrf.mxu0
    %v291 = vpop.f32.mrf.mxu0
    %v292 = vadd.f32 %v100, %v291
    %v293 = vpop.f32.mrf.mxu0
    %294 = vdwg.mxu0
    %v295 = vmax.f32 %v233, 0.0
    %v296 = vmax.f32 %v236, 0.0
    %v297 = vmax.f32 %v241, 0.0
    %v298 = vmax.f32 %v244, 0.0
    %v299 = vmax.f32 %v249, 0.0
    %v300 = vmax.f32 %v252, 0.0
    %v301 = vmax.f32 %v257, 0.0
    %v302 = vmax.f32 %v260, 0.0
    %v303 = vmax.f32 %v265, 0.0
    %v304 = vmax.f32 %v268, 0.0
    %v305 = vmax.f32 %v273, 0.0
    %v306 = vmax.f32 %v276, 0.0
    %v307 = vmax.f32 %v281, 0.0
    %v308 = vmax.f32 %v284, 0.0
    %v309 = vmax.f32 %v289, 0.0
    %v310 = vmax.f32 %v292, 0.0
    %v311 = vpack.c.bf16 %v296, %v295
    %v312 = vpack.c.bf16 %v298, %v297
    %v313 = vpack.c.bf16 %v300, %v299
    %v314 = vpack.c.bf16 %v302, %v301
    %v315 = vpack.c.bf16 %v304, %v303
    %v316 = vpack.c.bf16 %v306, %v305
    %v317 = vpack.c.bf16 %v308, %v307
    %v318 = vpack.c.bf16 %v310, %v309
    %v319 = vld [vmem:[#allocation7] sm:$0xf]
    %v320 = vld [vmem:[#allocation7 + $0x4] sm:$0xf]
    %v321 = vld [vmem:[#allocation7 + $0x8] sm:$0xf]
    %v322 = vld [vmem:[#allocation7 + $0xc] sm:$0xf]
    %v323 = vld [vmem:[#allocation7 + $0x10] sm:$0xf]
    %v324 = vld [vmem:[#allocation7 + $0x14] sm:$0xf]
    %v325 = vld [vmem:[#allocation7 + $0x18] sm:$0xf]
    %v326 = vld [vmem:[#allocation7 + $0x1c] sm:$0xf]
    %v327 = vld [vmem:[#allocation7 + $0x20] sm:$0xf]
    %v328 = vld [vmem:[#allocation7 + $0x24] sm:$0xf]
    %v329 = vld [vmem:[#allocation7 + $0x28] sm:$0xf]
    %v330 = vld [vmem:[#allocation7 + $0x2c] sm:$0xf]
    %v331 = vld [vmem:[#allocation7 + $0x30] sm:$0xf]
    %v332 = vld [vmem:[#allocation7 + $0x34] sm:$0xf]
    %v333 = vld [vmem:[#allocation7 + $0x38] sm:$0xf]
    %v334 = vld [vmem:[#allocation7 + $0x3c] sm:$0xf]
    %v335 = vld [vmem:[%s4] sm:$0x1]
    %v337 = vlaneseq
    %v338 = vshrl.u32 %v337, 7
    %v339 = vsub.s32 0, %v338
    %v340 = vrot.slane %v335, %v339
    %v358 = vunpack.c.l.b16 %v319
    %v359 = vunpack.c.l.b16 %v320
    %v360 = vunpack.c.l.b16 %v321
    %v361 = vunpack.c.l.b16 %v322
    %v362 = vunpack.c.l.b16 %v323
    %v363 = vunpack.c.l.b16 %v324
    %v364 = vunpack.c.l.b16 %v325
    %v365 = vunpack.c.l.b16 %v326
    %v366 = vunpack.c.l.b16 %v327
    %v367 = vunpack.c.l.b16 %v328
    %v368 = vunpack.c.l.b16 %v329
    %v369 = vunpack.c.l.b16 %v330
    %v370 = vunpack.c.l.b16 %v331
    %v371 = vunpack.c.l.b16 %v332
    %v372 = vunpack.c.l.b16 %v333
    %v373 = vunpack.c.l.b16 %v334
    %v374 = vpack.c.b16 %v359, %v358
    %v375 = vpack.c.b16 %v361, %v360
    %v376 = vpack.c.b16 %v363, %v362
    %v377 = vpack.c.b16 %v365, %v364
    %v378 = vpack.c.b16 %v367, %v366
    %v379 = vpack.c.b16 %v369, %v368
    %v380 = vpack.c.b16 %v371, %v370
    %v381 = vpack.c.b16 %v373, %v372
    %390 = vmatprep.subr.bf16.mxu0 0
    %391 = vmatpush1.bf16.msra.mxu0 %v381
    %392 = vmatprep.subr.bf16.mxu0 0
    %393 = vmatpush1.bf16.msra.mxu0 %v380
    %394 = vmatprep.subr.bf16.mxu0 0
    %395 = vmatpush1.bf16.msra.mxu0 %v379
    %396 = vmatprep.subr.bf16.mxu0 0
    %397 = vmatpush1.bf16.msra.mxu0 %v378
    %398 = vmatprep.subr.bf16.mxu0 0
    %399 = vmatpush1.bf16.msra.mxu0 %v377
    %400 = vmatprep.subr.bf16.mxu0 0
    %401 = vmatpush1.bf16.msra.mxu0 %v376
    %402 = vmatprep.subr.bf16.mxu0 0
    %403 = vmatpush1.bf16.msra.mxu0 %v375
    %404 = vmatprep.subr.bf16.mxu0 0
    %405 = vmatpush1.bf16.msra.mxu0 %v374
    %406 = vmatprep.subr.bf16.mxu0 0
    %407 = vmatpush2.bf16.msra.mxu0 0
    %408 = vmatprep.subr.bf16.mxu0 0
    %409 = vmatpush2.bf16.msra.mxu0 0
    %410 = vmatprep.subr.bf16.mxu0 0
    %411 = vmatpush2.bf16.msra.mxu0 0
    %412 = vmatprep.subr.bf16.mxu0 0
    %413 = vmatpush2.bf16.msra.mxu0 0
    %414 = vmatprep.subr.bf16.mxu0 0
    %415 = vmatpush2.bf16.msra.mxu0 0
    %416 = vmatprep.subr.bf16.mxu0 0
    %417 = vmatpush2.bf16.msra.mxu0 0
    %418 = vmatprep.subr.bf16.mxu0 0
    %419 = vmatpush2.bf16.msra.mxu0 0
    %420 = vmatprep.subr.bf16.mxu0 0
    %421 = vmatpush2.bf16.msra.mxu0 0
    %422 = vmatprep.mubr.bf16.mxu0 0
    %423 = vmatmul.mubr.bf16.gmra.mxu0 %v311
    %v424 = vpop.f32.mrf.mxu0
    %v425 = vadd.f32 %v340, %v424
    %v426 = vpop.f32.mrf.mxu0
    %v427 = vpop.f32.mrf.mxu0
    %v428 = vadd.f32 %v340, %v427
    %v429 = vpop.f32.mrf.mxu0
    %430 = vmatprep.mubr.bf16.mxu0 0
    %431 = vmatmul.mubr.bf16.gmra.mxu0 %v312
    %v432 = vpop.f32.mrf.mxu0
    %v433 = vadd.f32 %v340, %v432
    %v434 = vpop.f32.mrf.mxu0
    %v435 = vpop.f32.mrf.mxu0
    %v436 = vadd.f32 %v340, %v435
    %v437 = vpop.f32.mrf.mxu0
    %438 = vmatprep.mubr.bf16.mxu0 0
    %439 = vmatmul.mubr.bf16.gmra.mxu0 %v313
    %v440 = vpop.f32.mrf.mxu0
    %v441 = vadd.f32 %v340, %v440
    %v442 = vpop.f32.mrf.mxu0
    %v443 = vpop.f32.mrf.mxu0
    %v444 = vadd.f32 %v340, %v443
    %v445 = vpop.f32.mrf.mxu0
    %446 = vmatprep.mubr.bf16.mxu0 0
    %447 = vmatmul.mubr.bf16.gmra.mxu0 %v314
    %v448 = vpop.f32.mrf.mxu0
    %v449 = vadd.f32 %v340, %v448
    %v450 = vpop.f32.mrf.mxu0
    %v451 = vpop.f32.mrf.mxu0
    %v452 = vadd.f32 %v340, %v451
    %v453 = vpop.f32.mrf.mxu0
    %454 = vmatprep.mubr.bf16.mxu0 0
    %455 = vmatmul.mubr.bf16.gmra.mxu0 %v315
    %v456 = vpop.f32.mrf.mxu0
    %v457 = vadd.f32 %v340, %v456
    %v458 = vpop.f32.mrf.mxu0
    %v459 = vpop.f32.mrf.mxu0
    %v460 = vadd.f32 %v340, %v459
    %v461 = vpop.f32.mrf.mxu0
    %462 = vmatprep.mubr.bf16.mxu0 0
    %463 = vmatmul.mubr.bf16.gmra.mxu0 %v316
    %v464 = vpop.f32.mrf.mxu0
    %v465 = vadd.f32 %v340, %v464
    %v466 = vpop.f32.mrf.mxu0
    %v467 = vpop.f32.mrf.mxu0
    %v468 = vadd.f32 %v340, %v467
    %v469 = vpop.f32.mrf.mxu0
    %470 = vmatprep.mubr.bf16.mxu0 0
    %471 = vmatmul.mubr.bf16.gmra.mxu0 %v317
    %v472 = vpop.f32.mrf.mxu0
    %v473 = vadd.f32 %v340, %v472
    %v474 = vpop.f32.mrf.mxu0
    %v475 = vpop.f32.mrf.mxu0
    %v476 = vadd.f32 %v340, %v475
    %v477 = vpop.f32.mrf.mxu0
    %478 = vmatprep.mubr.bf16.mxu0 0
    %479 = vmatmul.mubr.bf16.gmra.mxu0 %v318
    %v480 = vpop.f32.mrf.mxu0
    %v481 = vadd.f32 %v340, %v480
    %v482 = vpop.f32.mrf.mxu0
    %v483 = vpop.f32.mrf.mxu0
    %v484 = vadd.f32 %v340, %v483
    %v485 = vpop.f32.mrf.mxu0
    %486 = vdwg.mxu0
    %487 = vst [vmem:[#allocation8] sm:$0xff] %v425
    %488 = vst [vmem:[#allocation8 + $0x8] sm:$0xff] %v428
    %489 = vst [vmem:[#allocation8 + $0x10] sm:$0xff] %v433
    %490 = vst [vmem:[#allocation8 + $0x18] sm:$0xff] %v436
    %491 = vst [vmem:[#allocation8 + $0x20] sm:$0xff] %v441
    %492 = vst [vmem:[#allocation8 + $0x28] sm:$0xff] %v444
    %493 = vst [vmem:[#allocation8 + $0x30] sm:$0xff] %v449
    %494 = vst [vmem:[#allocation8 + $0x38] sm:$0xff] %v452
    %495 = vst [vmem:[#allocation8 + $0x40] sm:$0xff] %v457
    %496 = vst [vmem:[#allocation8 + $0x48] sm:$0xff] %v460
    %497 = vst [vmem:[#allocation8 + $0x50] sm:$0xff] %v465
    %498 = vst [vmem:[#allocation8 + $0x58] sm:$0xff] %v468
    %499 = vst [vmem:[#allocation8 + $0x60] sm:$0xff] %v473
    %500 = vst [vmem:[#allocation8 + $0x68] sm:$0xff] %v476
    %501 = vst [vmem:[#allocation8 + $0x70] sm:$0xff] %v481
    %502 = vst [vmem:[#allocation8 + $0x78] sm:$0xff] %v484
    // Predicated region
    $region34: #{tpu_custom_call.1} parent=1 // pred_check
      _
    $region35: #{tpu_custom_call.1} parent=1 // pred_check_branch
      %504 = sbr.rel (0) target = $region37
    $region36: #{tpu_custom_call.1} parent=1 // pred_region
      %s506 = ssub.s32 2048, 2048
      %507 = vsyncadd [#allocation4], %s506
      %s508 = sshll.u32 [#allocation8], 4
      %s509 = int_to_ptr.vmem [resolvable:$true] %s508
      %514 = dma.vmem_to_hbm [thread:$0]  %s509, 2048, %s5, [#allocation4], 128, 128, 8
    $region37: #{tpu_custom_call.1} parent=1 // pred_fallthru
      _
    // Predicated region
    $region38: #{tpu_custom_call.1} parent=1 // pred_check
      _
    $region39: #{tpu_custom_call.1} parent=1 // pred_check_branch
      %516 = sbr.rel (0) target = $region41
    $region40: #{tpu_custom_call.1} parent=1 // pred_region
      %517 = dma.done [#allocation4], 2048
    $region41: #{tpu_custom_call.1} parent=1 // pred_fallthru
      _
    %518 = vsyncpa [#allocation3], 1
    %519 = vsyncpa [#allocation6], 1
    %520 = vsyncpa [#allocation4], 1

</llo_original>
